<compile_context>
chip_gen: v6e
topology: v6e:2x2x1
jax: 0.10.0
libtpu: 0.0.40
codegen_flags: <defaults>
</compile_context>

<pallas_src>
import jax
import jax.numpy as jnp
from jax.experimental import pallas as pl
from jax.experimental.pallas import tpu as pltpu


def _fused_kernel(xa_ref, wa_ref, o_ref):
    # xa_ref: (Bt, K+1)  activations augmented with a ones column
    # wa_ref: (K+1, N)   weight.T with the additive tensor folded into the last row
    # o_ref : (Bt, N)
    xa = xa_ref[...]
    wa = wa_ref[...]

    if xa_ref.shape[0] >= 8:
        # Batched tile: one MXU matmul (K is tiny; MXU pads it for free) and it
        # frees VALU/XLU slots that the broadcast chain would otherwise burn.
        y = jnp.dot(xa, wa, preferred_element_type=jnp.float32)
    else:
        # Degenerate tiny-M case (B < one sublane tile): stay on the VPU with an
        # unrolled broadcast-FMA chain — no MXU push/pop latency for one row.
        y = xa[:, 0:1] * wa[0:1, :]
        for k in range(1, xa_ref.shape[1]):
            y = y + xa[:, k:k + 1] * wa[k:k + 1, :]

    # relu
    o_ref[...] = jnp.maximum(y, 0.0).astype(o_ref.dtype)


def linear_add_relu(x, w, some_tensor, *, batch_tile=512):
    """relu(x @ w.T + some_tensor).

    x:           (B, K) f32
    w:           (N, K) f32  (torch Linear layout)
    some_tensor: (1, N) f32  (broadcast over batch)
    """
    B, K = x.shape
    N = w.shape[0]

    # Host-side packing (constant-foldable for fixed weight): fold the additive
    # tensor into an augmented weight and give x a ones column.
    #   [x | 1] @ [[w.T], [some_tensor]] == x @ w.T + some_tensor
    wa = jnp.concatenate([w.T, some_tensor.reshape(1, N)], axis=0)          # (K+1, N)
    xa = jnp.concatenate([x, jnp.ones((B, 1), dtype=x.dtype)], axis=1)      # (B, K+1)
    Ka = K + 1

    if B <= batch_tile:
        # Single un-pipelined invocation: whole-array VMEM specs, no grid, no
        # 1-point-grid software-pipeline setup.
        vmem = pl.BlockSpec(memory_space=pltpu.MemorySpace.VMEM)
        return pl.pallas_call(
            _fused_kernel,
            out_shape=jax.ShapeDtypeStruct((B, N), jnp.float32),
            in_specs=[vmem, vmem],
            out_specs=vmem,
        )(xa, wa)

    # Batched path: grid over batch with large tiles, resident augmented weight.
    num_tiles = pl.cdiv(B, batch_tile)
    padded_B = num_tiles * batch_tile
    if padded_B != B:
        xa = jnp.concatenate(
            [xa, jnp.zeros((padded_B - B, Ka), dtype=xa.dtype)], axis=0)

    out = pl.pallas_call(
        _fused_kernel,
        out_shape=jax.ShapeDtypeStruct((padded_B, N), jnp.float32),
        grid=(num_tiles,),
        in_specs=[
            pl.BlockSpec((batch_tile, Ka), lambda i: (i, 0)),
            pl.BlockSpec((Ka, N), lambda i: (0, 0)),   # VMEM-resident across steps
        ],
        out_specs=pl.BlockSpec((batch_tile, N), lambda i: (i, 0)),
        compiler_params=pltpu.CompilerParams(
            dimension_semantics=("parallel",)),        # shards across v7x's 2 TCs
    )(xa, wa)
    return out[:B]


def make_params():
    # Deterministic weight: zeros((8, 4)) with weight[i, i] = 1 for i in range(4)
    w = jnp.zeros((8, 4), dtype=jnp.float32)
    w = w.at[jnp.arange(4), jnp.arange(4)].set(1.0)
    return w


if __name__ == "__main__":
    key = jax.random.PRNGKey(0)
    k_x, k_t, k_b = jax.random.split(key, 3)

    # Input consistent with the module: x1 = torch.randn(1, 4)
    x1 = jax.random.normal(k_x, (1, 4), dtype=jnp.float32)

    # `some_tensor` (undefined global in the reference) — deterministic (1, 8) tensor
    some_tensor = jax.random.normal(k_t, (1, 8), dtype=jnp.float32)

    w = make_params()

    # --- B = 1 path (matches the original module's shapes) ---
    out = linear_add_relu(x1, w, some_tensor)
    jax.block_until_ready(out)
    ref = jnp.maximum(x1 @ w.T + some_tensor, 0.0)
    assert out.shape == (1, 8)
    assert jnp.allclose(out, ref, atol=1e-6), (out, ref)

    # --- batched path sanity check (grid + MXU dot + resident weight) ---
    xb = jax.random.normal(k_b, (1024, 4), dtype=jnp.float32)
    outb = linear_add_relu(xb, w, some_tensor)
    jax.block_until_ready(outb)
    refb = jnp.maximum(xb @ w.T + some_tensor, 0.0)
    assert outb.shape == (1024, 8)
    assert jnp.allclose(outb, refb, atol=1e-5), "batched path mismatch"

    print("KERNEL_OK")
</pallas_src>

<mosaic_0001>
module attributes {stable_mosaic.version = 11 : i64} {
  func.func @_fused_kernel(%arg0: memref<1x5xf32, #tpu.memory_space<vmem>>, %arg1: memref<5x8xf32, #tpu.memory_space<vmem>>, %arg2: memref<1x8xf32, #tpu.memory_space<vmem>>) attributes {dimension_semantics = [], scalar_prefetch = 0 : i64, scratch_operands = 0 : i64, tpu.core_type = #tpu.core_type<tc>} {
    %c0 = arith.constant 0 : index
    %c0_0 = arith.constant 0 : index
    %0 = vector.load %arg0[%c0, %c0_0] : memref<1x5xf32, #tpu.memory_space<vmem>>, vector<1x5xf32>
    %c0_1 = arith.constant 0 : index
    %c0_2 = arith.constant 0 : index
    %1 = vector.load %arg1[%c0_1, %c0_2] : memref<5x8xf32, #tpu.memory_space<vmem>>, vector<5x8xf32>
    %2 = vector.extract_strided_slice %0 {offsets = [0, 0], sizes = [1, 1], strides = [1, 1]} : vector<1x5xf32> to vector<1x1xf32>
    %3 = vector.extract_strided_slice %1 {offsets = [0, 0], sizes = [1, 8], strides = [1, 1]} : vector<5x8xf32> to vector<1x8xf32>
    %4 = vector.broadcast %2 : vector<1x1xf32> to vector<1x8xf32>
    %5 = arith.mulf %4, %3 : vector<1x8xf32>
    %6 = vector.extract_strided_slice %0 {offsets = [0, 1], sizes = [1, 1], strides = [1, 1]} : vector<1x5xf32> to vector<1x1xf32>
    %7 = vector.extract_strided_slice %1 {offsets = [1, 0], sizes = [1, 8], strides = [1, 1]} : vector<5x8xf32> to vector<1x8xf32>
    %8 = vector.broadcast %6 : vector<1x1xf32> to vector<1x8xf32>
    %9 = arith.mulf %8, %7 : vector<1x8xf32>
    %10 = arith.addf %5, %9 : vector<1x8xf32>
    %11 = vector.extract_strided_slice %0 {offsets = [0, 2], sizes = [1, 1], strides = [1, 1]} : vector<1x5xf32> to vector<1x1xf32>
    %12 = vector.extract_strided_slice %1 {offsets = [2, 0], sizes = [1, 8], strides = [1, 1]} : vector<5x8xf32> to vector<1x8xf32>
    %13 = vector.broadcast %11 : vector<1x1xf32> to vector<1x8xf32>
    %14 = arith.mulf %13, %12 : vector<1x8xf32>
    %15 = arith.addf %10, %14 : vector<1x8xf32>
    %16 = vector.extract_strided_slice %0 {offsets = [0, 3], sizes = [1, 1], strides = [1, 1]} : vector<1x5xf32> to vector<1x1xf32>
    %17 = vector.extract_strided_slice %1 {offsets = [3, 0], sizes = [1, 8], strides = [1, 1]} : vector<5x8xf32> to vector<1x8xf32>
    %18 = vector.broadcast %16 : vector<1x1xf32> to vector<1x8xf32>
    %19 = arith.mulf %18, %17 : vector<1x8xf32>
    %20 = arith.addf %15, %19 : vector<1x8xf32>
    %21 = vector.extract_strided_slice %0 {offsets = [0, 4], sizes = [1, 1], strides = [1, 1]} : vector<1x5xf32> to vector<1x1xf32>
    %22 = vector.extract_strided_slice %1 {offsets = [4, 0], sizes = [1, 8], strides = [1, 1]} : vector<5x8xf32> to vector<1x8xf32>
    %23 = vector.broadcast %21 : vector<1x1xf32> to vector<1x8xf32>
    %24 = arith.mulf %23, %22 : vector<1x8xf32>
    %25 = arith.addf %20, %24 : vector<1x8xf32>
    %cst = arith.constant 0.000000e+00 : f32
    %26 = vector.broadcast %cst : f32 to vector<1x8xf32>
    %27 = arith.maximumf %25, %26 : vector<1x8xf32>
    %c0_3 = arith.constant 0 : index
    %c0_4 = arith.constant 0 : index
    %28 = vector.load %arg2[%c0_3, %c0_4] : memref<1x8xf32, #tpu.memory_space<vmem>>, vector<1x8xf32>
    tpu.vector_store %arg2[%c0_3, %c0_4], %27 {strides = array<i32>} : memref<1x8xf32, #tpu.memory_space<vmem>>, vector<1x8xf32>,
    return
  }
}

</mosaic_0001>

<llo_original>
// kernel: tpu_custom_call.1
$region0: #{tpu_custom_call.1}
  #allocation0 [shape = 'u32[]', space=smem, size = 0x4, offset = 0x4, fixed_abs, tag = 'smem constant byte address 0x4 - core index']
  #allocation1 [shape = 'u32[144,128]{1,0:T(1,128)}', space=vmem, size = 0x12000, scoped, tag = 'internal scratch']
  %s0 = inlined_call_operand.hbm [shape: f32[1,5], index: 0, kind: input, shape index: {}]
  %s1 = inlined_call_operand.hbm [shape: f32[5,8], index: 1, kind: input, shape index: {}]
  %s2 = inlined_call_operand.hbm [shape: f32[1,8], index: 2, kind: output, shape index: {}]
  %s3 = sld [smem:[#allocation0]]
  $region26: #{tpu_custom_call.1} parent=0
    _
  %s5 = ssub.s32 1, %s3
  %s6 = scalar_select 0, %s5, %s3
  $region1: #{tpu_custom_call.1} parent=0
    #allocation2 [shape = 'u8[512]{0}', space=vmem, size = 0x400, scoped, tag = 'input window, operand 0, single buffered']
    #allocation3 [shape = 's32[1]{0}', space=sflag, size = 0x4, scoped, tag = 'scoped memory for tpu_custom_call.1']
    #allocation4 [shape = 's32[1]{0}', space=sflag, size = 0x4, scoped, tag = 'scoped memory for tpu_custom_call.1']
    #allocation5 [shape = 'u8[4096]{0}', space=vmem, size = 0x1000, scoped, tag = 'input window, operand 1, single buffered']
    #allocation6 [shape = 's32[1]{0}', space=sflag, size = 0x4, scoped, tag = 'scoped memory for tpu_custom_call.1']
    #allocation7 [shape = 'u8[512]{0}', space=vmem, size = 0x400, scoped, tag = 'output window, operand 0, single buffered']
    %7 = vsyncpa [#allocation3], 0
    %8 = vsyncpa [#allocation6], 0
    %9 = vsyncpa [#allocation4], 0
    // Predicated region
    $region2: #{tpu_custom_call.1} parent=1 // pred_check
      _
    $region3: #{tpu_custom_call.1} parent=1 // pred_check_branch
      %11 = sbr.rel (0) target = $region5
    $region4: #{tpu_custom_call.1} parent=1 // pred_region
      %s13 = ssub.s32 16, 16
      %14 = vsyncadd [#allocation3], %s13
      %s16 = sshll.u32 [#allocation2], 4
      %s17 = int_to_ptr.vmem [resolvable:$true] %s16
      %19 = dma.hbm_to_vmem [thread:$0]  %s0, 16, %s17, [#allocation3]
    $region5: #{tpu_custom_call.1} parent=1 // pred_fallthru
      _
    // Predicated region
    $region6: #{tpu_custom_call.1} parent=1 // pred_check
      _
    $region7: #{tpu_custom_call.1} parent=1 // pred_check_branch
      %21 = sbr.rel (0) target = $region9
    $region8: #{tpu_custom_call.1} parent=1 // pred_region
      %s23 = ssub.s32 128, 128
      %24 = vsyncadd [#allocation6], %s23
      %s26 = sshll.u32 [#allocation5], 4
      %s27 = int_to_ptr.vmem [resolvable:$true] %s26
      %29 = dma.hbm_to_vmem [thread:$0]  %s1, 128, %s27, [#allocation6]
    $region9: #{tpu_custom_call.1} parent=1 // pred_fallthru
      _
    // Predicated region
    $region10: #{tpu_custom_call.1} parent=1 // pred_check
      _
    $region11: #{tpu_custom_call.1} parent=1 // pred_check_branch
      %31 = sbr.rel (0) target = $region13
    $region12: #{tpu_custom_call.1} parent=1 // pred_region
      %32 = dma.done [#allocation3], 16
    $region13: #{tpu_custom_call.1} parent=1 // pred_fallthru
      _
    // Predicated region
    $region14: #{tpu_custom_call.1} parent=1 // pred_check
      _
    $region15: #{tpu_custom_call.1} parent=1 // pred_check_branch
      %34 = sbr.rel (0) target = $region17
    $region16: #{tpu_custom_call.1} parent=1 // pred_region
      %35 = dma.done [#allocation6], 128
    $region17: #{tpu_custom_call.1} parent=1 // pred_fallthru
      _
    %v36 = vld [vmem:[#allocation2] sm:$0x1]
    %v37 = vld [vmem:[#allocation5] sm:$0x1f]
    %39 = vset.pattern.permute.xlu0 0
    %40 = vperm.xlu0 %39, %v36
    %v41 = vpop.permute.xlu0 %40
    %v43 = vlaneseq
    %v44 = vshrl.u32 %v43, 7
    %v45 = vsub.s32 0, %v44
    %v46 = vrot.slane %v41, %v45
    %v47 = vmul.f32 %v46, %v37
    %48 = vset.pattern.permute.xlu0 1
    %49 = vperm.xlu0 %48, %v36
    %v50 = vpop.permute.xlu0 %49
    %v52 = vlaneseq
    %v53 = vshrl.u32 %v52, 7
    %v54 = vsub.s32 0, %v53
    %v55 = vrot.slane %v50, %v54
    %v56 = vmul.f32 %v55, %v37
    %v58 = vrot.slane %v56, 1
    %v60 = vadd.f32 %v47, %v58
    %61 = vset.pattern.permute.xlu0 2
    %62 = vperm.xlu0 %61, %v36
    %v63 = vpop.permute.xlu0 %62
    %v65 = vlaneseq
    %v66 = vshrl.u32 %v65, 7
    %v67 = vsub.s32 0, %v66
    %v68 = vrot.slane %v63, %v67
    %v69 = vmul.f32 %v68, %v37
    %v71 = vrot.slane %v69, 2
    %v73 = vadd.f32 %v60, %v71
    %74 = vset.pattern.permute.xlu0 3
    %75 = vperm.xlu0 %74, %v36
    %v76 = vpop.permute.xlu0 %75
    %v78 = vlaneseq
    %v79 = vshrl.u32 %v78, 7
    %v80 = vsub.s32 0, %v79
    %v81 = vrot.slane %v76, %v80
    %v82 = vmul.f32 %v81, %v37
    %v84 = vrot.slane %v82, 3
    %v86 = vadd.f32 %v73, %v84
    %87 = vset.pattern.permute.xlu0 4
    %88 = vperm.xlu0 %87, %v36
    %v89 = vpop.permute.xlu0 %88
    %v91 = vlaneseq
    %v92 = vshrl.u32 %v91, 7
    %v93 = vsub.s32 0, %v92
    %v94 = vrot.slane %v89, %v93
    %v95 = vmul.f32 %v94, %v37
    %v97 = vrot.slane %v95, 4
    %v99 = vadd.f32 %v86, %v97
    %v100 = vmax.f32 %v99, 0.0
    %vm101 = vcmask 57344
    %102 = vst.msk [vmem:[#allocation7] sm:$0x1] %vm101, %v100
    // Predicated region
    $region18: #{tpu_custom_call.1} parent=1 // pred_check
      _
    $region19: #{tpu_custom_call.1} parent=1 // pred_check_branch
      %104 = sbr.rel (0) target = $region21
    $region20: #{tpu_custom_call.1} parent=1 // pred_region
      %s106 = ssub.s32 16, 16
      %107 = vsyncadd [#allocation4], %s106
      %s109 = sshll.u32 [#allocation7], 4
      %s110 = int_to_ptr.vmem [resolvable:$true] %s109
      %112 = dma.vmem_to_hbm [thread:$0]  %s110, 16, %s2, [#allocation4]
    $region21: #{tpu_custom_call.1} parent=1 // pred_fallthru
      _
    // Predicated region
    $region22: #{tpu_custom_call.1} parent=1 // pred_check
      _
    $region23: #{tpu_custom_call.1} parent=1 // pred_check_branch
      %114 = sbr.rel (0) target = $region25
    $region24: #{tpu_custom_call.1} parent=1 // pred_region
      %115 = dma.done [#allocation4], 16
    $region25: #{tpu_custom_call.1} parent=1 // pred_fallthru
      _
    %116 = vsyncpa [#allocation3], 1
    %117 = vsyncpa [#allocation6], 1
    %118 = vsyncpa [#allocation4], 1

</llo_original>
